<compile_context>
chip_gen: v7x
topology: tpu7x:2x2x1
jax: 0.10.0
libtpu: 0.0.40
codegen_flags: <defaults>
</compile_context>

<pallas_src>
import functools

import jax
import jax.numpy as jnp
from jax.experimental import pallas as pl
from jax.experimental.pallas import tpu as pltpu

# ---- quantization constants (deterministic, synthetic calibration) ----------
Q_SCALE = 0.05
INV_Q_SCALE = 1.0 / Q_SCALE
Q_ZERO_POINT = 0.0          # qint8 symmetric; clamp bounds below assume zp == 0
QMIN, QMAX = -128.0, 127.0


def _round_up(x, m):
    return ((x + m - 1) // m) * m


def _fake_quant(x):
    # round -> +zp -> clamp to int8 grid -> -zp.  Result is an exact integer in
    # [-128, 127]; the dequant scale Q_SCALE is folded into the GEMM epilogue.
    q = jnp.round(x * INV_Q_SCALE) + Q_ZERO_POINT
    q = jnp.clip(q, QMIN, QMAX) - Q_ZERO_POINT
    return q


# ----------------------------- kernels ---------------------------------------
def _quant_kernel(x_ref, o_ref):
    # Elementwise fake-quant, emitted once per x element.  q is an exact
    # integer in [-128, 127] -> exactly representable in bf16 (native MXU path,
    # half the x DMA bytes into the GEMM).
    o_ref[...] = _fake_quant(x_ref[...]).astype(jnp.bfloat16)


def _gemm_single_kernel(x_ref, w_ref, txt_ref, o_ref, *, inline_quant):
    # Single K block: no accumulator scratch, no pl.when phases.
    if inline_quant:
        xq = _fake_quant(x_ref[...]).astype(jnp.bfloat16)
    else:
        xq = x_ref[...]                      # already bf16 q-values
    acc = jnp.dot(xq, w_ref[...], preferred_element_type=jnp.float32)
    # Epilogue: fold dequant scale, add (bias + text).  DeQuantStub = identity.
    o_ref[...] = acc * Q_SCALE + txt_ref[...]


def _gemm_multi_kernel(x_ref, w_ref, txt_ref, o_ref, acc_ref, *, inline_quant):
    # K-innermost reduction with a resident f32 VMEM accumulator.
    k = pl.program_id(2)

    @pl.when(k == 0)
    def _():
        acc_ref[...] = jnp.zeros_like(acc_ref)

    if inline_quant:
        xq = _fake_quant(x_ref[...]).astype(jnp.bfloat16)
    else:
        xq = x_ref[...]
    acc_ref[...] += jnp.dot(xq, w_ref[...], preferred_element_type=jnp.float32)

    @pl.when(k == pl.num_programs(2) - 1)
    def _():
        o_ref[...] = acc_ref[...] * Q_SCALE + txt_ref[...]


# ----------------------------- planning / budgets -----------------------------
def _plan_kn(d, hid):
    # K/N tiling depends only on the weight shape -> decided once at prepare
    # time so the padded bf16 weight can be cached across calls.
    tk = min(_round_up(d, 128), 2048)
    d_p = _round_up(d, tk)
    tn = min(_round_up(hid, 128), 512)
    hid_p = _round_up(hid, tn)
    return tk, d_p, tn, hid_p


def _vmem_budget_quant(tm, tk):
    tile = tm * tk * (4 + 2)                 # f32 in + bf16 out, double-buffered
    return int(min(48 * 1024 * 1024, max(4 * 1024 * 1024, 4 * tile)))


def _vmem_budget_gemm(tm, tn, tk, x_bytes, w_buffers):
    x_tile = tm * tk * x_bytes
    w_tile = tk * tn * 2                     # bf16 weight stream
    txt_tile = tm * tn * 4
    out_tile = tm * tn * 4
    acc = tm * tn * 4
    total = 2 * (x_tile + txt_tile + out_tile) + w_buffers * w_tile + acc
    # 2x headroom; cap well under v7x's 64 MiB physical VMEM (fine on 128 MiB
    # v5e/v6e parts as well).
    return int(min(48 * 1024 * 1024, max(8 * 1024 * 1024, 2 * total)))


# ----------------------------- params ----------------------------------------
def init_params(key, d, hid, vocab):
    k1, k2, k3 = jax.random.split(key, 3)
    return {
        "w": jax.random.normal(k1, (d, hid), jnp.float32) * 0.02,
        "b": jax.random.normal(k2, (1, hid), jnp.float32) * 0.01,
        "emb": jax.random.normal(k3, (vocab, hid), jnp.float32) * 0.02,
    }


def prepare_params(params):
    """One-time preprocessing: pad + cast W to bf16, fix K/N tile plan."""
    d, hid = params["w"].shape
    tk, d_p, tn, hid_p = _plan_kn(d, hid)
    # NOTE: bf16 weight is an intentional approximation (the reference keeps
    # fp32 weights); q values are exact in bf16, validated vs fp32 ref below.
    w_pad = jnp.pad(params["w"].astype(jnp.bfloat16),
                    ((0, d_p - d), (0, hid_p - hid)))
    return dict(
        w_pad=w_pad,
        b=params["b"].astype(jnp.float32).reshape(1, -1),
        emb=params["emb"].astype(jnp.float32),
        d=d, hid=hid, tk=tk, d_p=d_p, tn=tn, hid_p=hid_p,
    )


# ----------------------------- forward ----------------------------------------
def quantized_model_forward(x_nchw, text_ids, prepared, is_train=True):
    """Wrapper mirroring QuantizedModel.forward(x, text, is_train=True)."""
    del is_train  # TODO(synk): is_train only selects train/eval inside the
    #                unspecified model_fp32; no behavioral branch to reproduce.
    n = x_nchw.shape[0]
    d, hid = prepared["d"], prepared["hid"]
    tk, d_p = prepared["tk"], prepared["d_p"]
    tn, hid_p = prepared["tn"], prepared["hid_p"]

    x_flat = x_nchw.reshape(n, d).astype(jnp.float32)

    # glue (tiny, irregular): text embedding gather + mean pool in plain XLA;
    # bias pre-added here so the kernel has one fewer input stream.
    txt_emb = jnp.take(prepared["emb"], text_ids, axis=0)       # [N, T, HID]
    txt_feat = jnp.mean(txt_emb, axis=1) + prepared["b"]        # [N, HID]

    # --- batch (M) tiling --------------------------------------------------
    m8 = _round_up(n, 8)
    if m8 >= 256:
        tm = 256          # match the 256-wide MXU on v6e/v7x at large M
    elif m8 >= 128:
        tm = 128
    else:
        tm = m8
    m_p = _round_up(m8, tm)
    m_blocks = m_p // tm

    # v7x megacore: guarantee >=2 blocks on a "parallel" axis when the batch
    # only gives one M block (no effect on single-TC v5e/v6e).
    if m_blocks == 1 and hid_p // tn == 1 and hid_p % 256 == 0:
        tn = hid_p // 2
    n_blocks = hid_p // tn
    k_blocks = d_p // tk

    x_pad = jnp.pad(x_flat, ((0, m_p - n), (0, d_p - d)))
    t_pad = jnp.pad(txt_feat, ((0, m_p - n), (0, hid_p - hid)))

    # --- QuantStub: fused when each x element is consumed exactly once ------
    inline_quant = (n_blocks == 1)
    if inline_quant:
        x_in = x_pad                      # f32; quant fused into the GEMM
        x_bytes = 4
    else:
        # pre-quantize once to bf16 q-values (not repeated per output-column
        # block j; halves x DMA bytes into the GEMM).
        x_in = pl.pallas_call(
            _quant_kernel,
            out_shape=jax.ShapeDtypeStruct((m_p, d_p), jnp.bfloat16),
            grid=(m_blocks, k_blocks),
            in_specs=[pl.BlockSpec((tm, tk), lambda i, k: (i, k))],
            out_specs=pl.BlockSpec((tm, tk), lambda i, k: (i, k)),
            compiler_params=pltpu.CompilerParams(
                dimension_semantics=("parallel", "arbitrary"),
                vmem_limit_bytes=_vmem_budget_quant(tm, tk),
            ),
        )(x_pad)
        x_bytes = 2

    # --- GEMM + epilogue -----------------------------------------------------
    w_buffers = 2
    if k_blocks >= 3:
        # W is the dominant streamed input in the mem-bound regime: a third
        # buffer hides DMA jitter cheaply when the K grid is long.
        w_spec = pl.BlockSpec((tk, tn), lambda i, j, k: (k, j),
                              pipeline_mode=pl.Buffered(3))
        w_buffers = 3
    else:
        w_spec = pl.BlockSpec((tk, tn), lambda i, j, k: (k, j))

    common = dict(
        out_shape=jax.ShapeDtypeStruct((m_p, hid_p), jnp.float32),
        grid=(m_blocks, n_blocks, k_blocks),
        in_specs=[
            pl.BlockSpec((tm, tk), lambda i, j, k: (i, k)),   # x (f32 or bf16)
            w_spec,                                           # W (bf16)
            pl.BlockSpec((tm, tn), lambda i, j, k: (i, j)),   # bias+text (f32)
        ],
        out_specs=pl.BlockSpec((tm, tn), lambda i, j, k: (i, j)),
        compiler_params=pltpu.CompilerParams(
            dimension_semantics=("parallel", "parallel", "arbitrary"),
            vmem_limit_bytes=_vmem_budget_gemm(tm, tn, tk, x_bytes, w_buffers),
        ),
    )

    if k_blocks == 1:
        # Small-problem fast path: single K step, no acc scratch, no pl.when.
        out = pl.pallas_call(
            functools.partial(_gemm_single_kernel, inline_quant=inline_quant),
            **common,
        )(x_in, prepared["w_pad"], t_pad)
    else:
        out = pl.pallas_call(
            functools.partial(_gemm_multi_kernel, inline_quant=inline_quant),
            scratch_shapes=[pltpu.VMEM((tm, tn), jnp.float32)],
            **common,
        )(x_in, prepared["w_pad"], t_pad)

    # DeQuantStub is identity on the fp32 result.
    return out[:n, :hid]


# ----------------------------- demo -------------------------------------------
if __name__ == "__main__":
    key = jax.random.PRNGKey(0)
    kx, kt, kp = jax.random.split(key, 3)

    # small shapes consistent with the forward: image x (NCHW) + text tokens
    N, C, H, W = 2, 4, 16, 16
    T, VOCAB, HID = 8, 32, 128
    D = C * H * W

    x = jax.random.normal(kx, (N, C, H, W), jnp.float32)
    text = jax.random.randint(kt, (N, T), 0, VOCAB, dtype=jnp.int32)

    params = init_params(kp, D, HID, VOCAB)
    prepared = prepare_params(params)            # one-time: pad + bf16-cast W

    out = quantized_model_forward(x, text, prepared, is_train=True)
    out = jax.block_until_ready(out)

    # pure-JAX fp32 reference: fake-quant -> linear(+bias) + mean text emb
    xq = _fake_quant(x.reshape(N, D).astype(jnp.float32)) * Q_SCALE
    txt_ref = jnp.mean(jnp.take(params["emb"], text, axis=0), axis=1)
    ref = xq @ params["w"] + params["b"] + txt_ref

    assert out.shape == (N, HID) and out.dtype == jnp.float32
    assert bool(jnp.all(jnp.isfinite(out)))
    assert bool(jnp.allclose(out, ref, rtol=5e-2, atol=5e-2))
    print("KERNEL_OK")
</pallas_src>

<mosaic_0001>
module attributes {stable_mosaic.version = 11 : i64} {
  func.func @_gemm_single_kernel(%arg0: i32, %arg1: i32, %arg2: i32, %arg3: memref<8x1024xf32, #tpu.memory_space<vmem>>, %arg4: memref<1024x128xbf16, #tpu.memory_space<vmem>>, %arg5: memref<8x128xf32, #tpu.memory_space<vmem>>, %arg6: memref<8x128xf32, #tpu.memory_space<vmem>>) attributes {dimension_semantics = [#tpu.dimension_semantics<parallel>, #tpu.dimension_semantics<parallel>, #tpu.dimension_semantics<arbitrary>], iteration_bounds = array<i64: 1, 1, 1>, scalar_prefetch = 0 : i64, scratch_operands = 0 : i64, tpu.core_type = #tpu.core_type<tc>, window_params = [{transform_indices = @transform_0, window_bounds = array<i64: 8, 1024>}, {transform_indices = @transform_1, window_bounds = array<i64: 1024, 128>}, {transform_indices = @transform_2, window_bounds = array<i64: 8, 128>}, {transform_indices = @transform_3, window_bounds = array<i64: 8, 128>}]} {
    %c0 = arith.constant 0 : index
    %c0_0 = arith.constant 0 : index
    %0 = vector.load %arg3[%c0, %c0_0] : memref<8x1024xf32, #tpu.memory_space<vmem>>, vector<8x1024xf32>
    %cst = arith.constant 2.000000e+01 : f32
    %1 = vector.broadcast %cst : f32 to vector<8x1024xf32>
    %2 = arith.mulf %0, %1 : vector<8x1024xf32>
    %3 = math.roundeven %2 : vector<8x1024xf32>
    %cst_1 = arith.constant 0.000000e+00 : f32
    %4 = vector.broadcast %cst_1 : f32 to vector<8x1024xf32>
    %5 = arith.addf %3, %4 : vector<8x1024xf32>
    %cst_2 = arith.constant -1.280000e+02 : f32
    %cst_3 = arith.constant 1.270000e+02 : f32
    %6 = vector.broadcast %cst_2 : f32 to vector<8x1024xf32>
    %7 = arith.maximumf %6, %5 : vector<8x1024xf32>
    %8 = vector.broadcast %cst_3 : f32 to vector<8x1024xf32>
    %9 = arith.minimumf %8, %7 : vector<8x1024xf32>
    %cst_4 = arith.constant 0.000000e+00 : f32
    %10 = vector.broadcast %cst_4 : f32 to vector<8x1024xf32>
    %11 = arith.subf %9, %10 : vector<8x1024xf32>
    %12 = arith.truncf %11 : vector<8x1024xf32> to vector<8x1024xbf16>
    %c0_5 = arith.constant 0 : index
    %c0_6 = arith.constant 0 : index
    %13 = vector.load %arg4[%c0_5, %c0_6] : memref<1024x128xbf16, #tpu.memory_space<vmem>>, vector<1024x128xbf16>
    %cst_7 = arith.constant dense<0.000000e+00> : vector<8x128xf32>
    %14 = tpu.matmul %12, %13, %cst_7 {dimension_numbers = #tpu.dot_dimension_numbers<[1], [0], [0], [1], [0, 0, 1, 1], [], []>} : vector<8x1024xbf16>, vector<1024x128xbf16>, vector<8x128xf32> -> vector<8x128xf32>
    %cst_8 = arith.constant 5.000000e-02 : f32
    %15 = vector.broadcast %cst_8 : f32 to vector<8x128xf32>
    %16 = arith.mulf %14, %15 : vector<8x128xf32>
    %c0_9 = arith.constant 0 : index
    %c0_10 = arith.constant 0 : index
    %17 = vector.load %arg5[%c0_9, %c0_10] : memref<8x128xf32, #tpu.memory_space<vmem>>, vector<8x128xf32>
    %18 = arith.addf %16, %17 : vector<8x128xf32>
    %c0_11 = arith.constant 0 : index
    %c0_12 = arith.constant 0 : index
    %19 = vector.load %arg6[%c0_11, %c0_12] : memref<8x128xf32, #tpu.memory_space<vmem>>, vector<8x128xf32>
    tpu.vector_store %arg6[%c0_11, %c0_12], %18 {strides = array<i32>} : memref<8x128xf32, #tpu.memory_space<vmem>>, vector<8x128xf32>,
    return
  }
  func.func @transform_0(%arg0: i32, %arg1: i32, %arg2: i32) -> (i32, i32) {
    %c0_i32 = arith.constant 0 : i32
    return %arg0, %arg2 : i32, i32
  }
  func.func @transform_1(%arg0: i32, %arg1: i32, %arg2: i32) -> (i32, i32) {
    %c0_i32 = arith.constant 0 : i32
    return %arg2, %arg1 : i32, i32
  }
  func.func @transform_2(%arg0: i32, %arg1: i32, %arg2: i32) -> (i32, i32) {
    %c0_i32 = arith.constant 0 : i32
    return %arg0, %arg1 : i32, i32
  }
  func.func @transform_3(%arg0: i32, %arg1: i32, %arg2: i32) -> (i32, i32) {
    %c0_i32 = arith.constant 0 : i32
    return %arg0, %arg1 : i32, i32
  }
}

</mosaic_0001>

<llo_original>
// kernel: tpu_custom_call.1
$region0: #{tpu_custom_call.1}
  #allocation0 [shape = 'u32[]', space=smem, size = 0x4, offset = 0x4, fixed_abs, tag = 'smem constant byte address 0x4 - core index']
  #allocation1 [shape = 'u32[144,128]{1,0:T(1,128)}', space=vmem, size = 0x12000, scoped, tag = 'internal scratch']
  %s0 = inlined_call_operand.hbm [shape: f32[8,1024], index: 0, kind: input, shape index: {}]
  %s1 = inlined_call_operand.hbm [shape: bf16[1024,128], index: 1, kind: input, shape index: {}]
  %s2 = inlined_call_operand.hbm [shape: f32[8,128], index: 2, kind: input, shape index: {}]
  %s3 = inlined_call_operand.hbm [shape: f32[8,128], index: 3, kind: output, shape index: {}]
  %s4 = sld [smem:[#allocation0]]
  $region34: #{tpu_custom_call.1} parent=0
    _
  %s6 = ssub.s32 1, %s4
  %s7 = scalar_select 0, %s6, %s4
  $region1: #{tpu_custom_call.1} parent=0
    #allocation2 [shape = 'u8[32768]{0}', space=vmem, size = 0x8000, scoped, tag = 'input window, operand 0, single buffered']
    #allocation3 [shape = 's32[1]{0}', space=sflag, size = 0x4, scoped, tag = 'scoped memory for tpu_custom_call.1']
    #allocation4 [shape = 's32[1]{0}', space=sflag, size = 0x4, scoped, tag = 'scoped memory for tpu_custom_call.1']
    #allocation5 [shape = 'u8[262144]{0}', space=vmem, size = 0x40000, scoped, tag = 'input window, operand 1, single buffered']
    #allocation6 [shape = 's32[1]{0}', space=sflag, size = 0x4, scoped, tag = 'scoped memory for tpu_custom_call.1']
    #allocation7 [shape = 'u8[4096]{0}', space=vmem, size = 0x1000, scoped, tag = 'input window, operand 2, single buffered']
    #allocation8 [shape = 'u8[4096]{0}', space=vmem, size = 0x1000, scoped, tag = 'output window, operand 0, single buffered']
    %8 = vsyncpa [#allocation3], 0
    %9 = vsyncpa [#allocation6], 0
    %10 = vsyncpa [#allocation4], 0
    // Predicated region
    $region2: #{tpu_custom_call.1} parent=1 // pred_check
      _
    $region3: #{tpu_custom_call.1} parent=1 // pred_check_branch
      %12 = sbr.rel (0) target = $region5
    $region4: #{tpu_custom_call.1} parent=1 // pred_region
      %s14 = ssub.s32 1024, 1024
      %15 = vsyncadd [#allocation3], %s14
      %s17 = sshll.u32 [#allocation2], 4
      %s18 = int_to_ptr.vmem [resolvable:$true] %s17
      %20 = dma.hbm_to_vmem [thread:$0]  %s0, 1024, %s18, [#allocation3]
    $region5: #{tpu_custom_call.1} parent=1 // pred_fallthru
      _
    // Predicated region
    $region6: #{tpu_custom_call.1} parent=1 // pred_check
      _
    $region7: #{tpu_custom_call.1} parent=1 // pred_check_branch
      %22 = sbr.rel (0) target = $region9
    $region8: #{tpu_custom_call.1} parent=1 // pred_region
      %s24 = ssub.s32 8192, 8192
      %25 = vsyncadd [#allocation6], %s24
      %s26 = sshll.u32 [#allocation5], 4
      %s27 = int_to_ptr.vmem [resolvable:$true] %s26
      %32 = dma.hbm_to_vmem [thread:$0]  %s1, 8192, %s27, [#allocation6], 64, 64, 4
    $region9: #{tpu_custom_call.1} parent=1 // pred_fallthru
      _
    // Predicated region
    $region10: #{tpu_custom_call.1} parent=1 // pred_check
      _
    $region11: #{tpu_custom_call.1} parent=1 // pred_check_branch
      %34 = sbr.rel (0) target = $region13
    $region12: #{tpu_custom_call.1} parent=1 // pred_region
      %s36 = ssub.s32 128, 128
      %37 = vsyncadd [#allocation6], %s36
      %s39 = sshll.u32 [#allocation7], 4
      %s40 = int_to_ptr.vmem [resolvable:$true] %s39
      %42 = dma.hbm_to_vmem [thread:$0]  %s2, 128, %s40, [#allocation6]
    $region13: #{tpu_custom_call.1} parent=1 // pred_fallthru
      _
    // Predicated region
    $region14: #{tpu_custom_call.1} parent=1 // pred_check
      _
    $region15: #{tpu_custom_call.1} parent=1 // pred_check_branch
      %44 = sbr.rel (0) target = $region17
    $region16: #{tpu_custom_call.1} parent=1 // pred_region
      %45 = dma.done [#allocation3], 1024
    $region17: #{tpu_custom_call.1} parent=1 // pred_fallthru
      _
    // Predicated region
    $region18: #{tpu_custom_call.1} parent=1 // pred_check
      _
    $region19: #{tpu_custom_call.1} parent=1 // pred_check_branch
      %47 = sbr.rel (0) target = $region21
    $region20: #{tpu_custom_call.1} parent=1 // pred_region
      %48 = dma.done [#allocation6], 8192
    $region21: #{tpu_custom_call.1} parent=1 // pred_fallthru
      _
    // Predicated region
    $region22: #{tpu_custom_call.1} parent=1 // pred_check
      _
    $region23: #{tpu_custom_call.1} parent=1 // pred_check_branch
      %50 = sbr.rel (0) target = $region25
    $region24: #{tpu_custom_call.1} parent=1 // pred_region
      %51 = dma.done [#allocation6], 128
    $region25: #{tpu_custom_call.1} parent=1 // pred_fallthru
      _
    %v53 = vld [vmem:[#allocation2] sm:$0xff]
    %v54 = vld [vmem:[#allocation2 + $0x8] sm:$0xff]
    %v55 = vld [vmem:[#allocation2 + $0x10] sm:$0xff]
    %v56 = vld [vmem:[#allocation2 + $0x18] sm:$0xff]
    %v57 = vld [vmem:[#allocation2 + $0x20] sm:$0xff]
    %v58 = vld [vmem:[#allocation2 + $0x28] sm:$0xff]
    %v59 = vld [vmem:[#allocation2 + $0x30] sm:$0xff]
    %v60 = vld [vmem:[#allocation2 + $0x38] sm:$0xff]
    %v61 = vmul.f32 %v53, 20.0
    %v62 = vmul.f32 %v54, 20.0
    %v63 = vmul.f32 %v55, 20.0
    %v64 = vmul.f32 %v56, 20.0
    %v65 = vmul.f32 %v57, 20.0
    %v66 = vmul.f32 %v58, 20.0
    %v67 = vmul.f32 %v59, 20.0
    %v68 = vmul.f32 %v60, 20.0
    %v69 = vround.ne.pseudo %v61
    %v70 = vround.ne.pseudo %v62
    %v71 = vround.ne.pseudo %v63
    %v72 = vround.ne.pseudo %v64
    %v73 = vround.ne.pseudo %v65
    %v74 = vround.ne.pseudo %v66
    %v75 = vround.ne.pseudo %v67
    %v76 = vround.ne.pseudo %v68
    %v77 = vadd.f32 %v69, 0.0
    %v78 = vadd.f32 %v70, 0.0
    %v79 = vadd.f32 %v71, 0.0
    %v80 = vadd.f32 %v72, 0.0
    %v81 = vadd.f32 %v73, 0.0
    %v82 = vadd.f32 %v74, 0.0
    %v83 = vadd.f32 %v75, 0.0
    %v84 = vadd.f32 %v76, 0.0
    %v85 = vmax.f32 %v77, -128.0
    %v86 = vmax.f32 %v78, -128.0
    %v87 = vmax.f32 %v79, -128.0
    %v88 = vmax.f32 %v80, -128.0
    %v89 = vmax.f32 %v81, -128.0
    %v90 = vmax.f32 %v82, -128.0
    %v91 = vmax.f32 %v83, -128.0
    %v92 = vmax.f32 %v84, -128.0
    %v93 = vmin.f32 %v85, 127.0
    %v94 = vmin.f32 %v86, 127.0
    %v95 = vmin.f32 %v87, 127.0
    %v96 = vmin.f32 %v88, 127.0
    %v97 = vmin.f32 %v89, 127.0
    %v98 = vmin.f32 %v90, 127.0
    %v99 = vmin.f32 %v91, 127.0
    %v100 = vmin.f32 %v92, 127.0
    %v101 = vpack.c.bf16 %v93, %v93
    %v102 = vpack.c.bf16 %v94, %v94
    %v103 = vpack.c.bf16 %v95, %v95
    %v104 = vpack.c.bf16 %v96, %v96
    %v105 = vpack.c.bf16 %v97, %v97
    %v106 = vpack.c.bf16 %v98, %v98
    %v107 = vpack.c.bf16 %v99, %v99
    %v108 = vpack.c.bf16 %v100, %v100
    %v109 = vld [vmem:[#allocation5] sm:$0xf]
    %v110 = vld [vmem:[#allocation5 + $0x4] sm:$0xf]
    %v111 = vld [vmem:[#allocation5 + $0x8] sm:$0xf]
    %v112 = vld [vmem:[#allocation5 + $0xc] sm:$0xf]
    %v113 = vld [vmem:[#allocation5 + $0x10] sm:$0xf]
    %v114 = vld [vmem:[#allocation5 + $0x14] sm:$0xf]
    %v115 = vld [vmem:[#allocation5 + $0x18] sm:$0xf]
    %v116 = vld [vmem:[#allocation5 + $0x1c] sm:$0xf]
    %v117 = vld [vmem:[#allocation5 + $0x20] sm:$0xf]
    %v118 = vld [vmem:[#allocation5 + $0x24] sm:$0xf]
    %v119 = vld [vmem:[#allocation5 + $0x28] sm:$0xf]
    %v120 = vld [vmem:[#allocation5 + $0x2c] sm:$0xf]
    %v121 = vld [vmem:[#allocation5 + $0x30] sm:$0xf]
    %v122 = vld [vmem:[#allocation5 + $0x34] sm:$0xf]
    %v123 = vld [vmem:[#allocation5 + $0x38] sm:$0xf]
    %v124 = vld [vmem:[#allocation5 + $0x3c] sm:$0xf]
    %v125 = vld [vmem:[#allocation5 + $0x40] sm:$0xf]
    %v126 = vld [vmem:[#allocation5 + $0x44] sm:$0xf]
    %v127 = vld [vmem:[#allocation5 + $0x48] sm:$0xf]
    %v128 = vld [vmem:[#allocation5 + $0x4c] sm:$0xf]
    %v129 = vld [vmem:[#allocation5 + $0x50] sm:$0xf]
    %v130 = vld [vmem:[#allocation5 + $0x54] sm:$0xf]
    %v131 = vld [vmem:[#allocation5 + $0x58] sm:$0xf]
    %v132 = vld [vmem:[#allocation5 + $0x5c] sm:$0xf]
    %v133 = vld [vmem:[#allocation5 + $0x60] sm:$0xf]
    %v134 = vld [vmem:[#allocation5 + $0x64] sm:$0xf]
    %v135 = vld [vmem:[#allocation5 + $0x68] sm:$0xf]
    %v136 = vld [vmem:[#allocation5 + $0x6c] sm:$0xf]
    %v137 = vld [vmem:[#allocation5 + $0x70] sm:$0xf]
    %v138 = vld [vmem:[#allocation5 + $0x74] sm:$0xf]
    %v139 = vld [vmem:[#allocation5 + $0x78] sm:$0xf]
    %v140 = vld [vmem:[#allocation5 + $0x7c] sm:$0xf]
    %v141 = vld [vmem:[#allocation5 + $0x80] sm:$0xf]
    %v142 = vld [vmem:[#allocation5 + $0x84] sm:$0xf]
    %v143 = vld [vmem:[#allocation5 + $0x88] sm:$0xf]
    %v144 = vld [vmem:[#allocation5 + $0x8c] sm:$0xf]
    %v145 = vld [vmem:[#allocation5 + $0x90] sm:$0xf]
    %v146 = vld [vmem:[#allocation5 + $0x94] sm:$0xf]
    %v147 = vld [vmem:[#allocation5 + $0x98] sm:$0xf]
    %v148 = vld [vmem:[#allocation5 + $0x9c] sm:$0xf]
    %v149 = vld [vmem:[#allocation5 + $0xa0] sm:$0xf]
    %v150 = vld [vmem:[#allocation5 + $0xa4] sm:$0xf]
    %v151 = vld [vmem:[#allocation5 + $0xa8] sm:$0xf]
    %v152 = vld [vmem:[#allocation5 + $0xac] sm:$0xf]
    %v153 = vld [vmem:[#allocation5 + $0xb0] sm:$0xf]
    %v154 = vld [vmem:[#allocation5 + $0xb4] sm:$0xf]
    %v155 = vld [vmem:[#allocation5 + $0xb8] sm:$0xf]
    %v156 = vld [vmem:[#allocation5 + $0xbc] sm:$0xf]
    %v157 = vld [vmem:[#allocation5 + $0xc0] sm:$0xf]
    %v158 = vld [vmem:[#allocation5 + $0xc4] sm:$0xf]
    %v159 = vld [vmem:[#allocation5 + $0xc8] sm:$0xf]
    %v160 = vld [vmem:[#allocation5 + $0xcc] sm:$0xf]
    %v161 = vld [vmem:[#allocation5 + $0xd0] sm:$0xf]
    %v162 = vld [vmem:[#allocation5 + $0xd4] sm:$0xf]
    %v163 = vld [vmem:[#allocation5 + $0xd8] sm:$0xf]
    %v164 = vld [vmem:[#allocation5 + $0xdc] sm:$0xf]
    %v165 = vld [vmem:[#allocation5 + $0xe0] sm:$0xf]
    %v166 = vld [vmem:[#allocation5 + $0xe4] sm:$0xf]
    %v167 = vld [vmem:[#allocation5 + $0xe8] sm:$0xf]
    %v168 = vld [vmem:[#allocation5 + $0xec] sm:$0xf]
    %v169 = vld [vmem:[#allocation5 + $0xf0] sm:$0xf]
    %v170 = vld [vmem:[#allocation5 + $0xf4] sm:$0xf]
    %v171 = vld [vmem:[#allocation5 + $0xf8] sm:$0xf]
    %v172 = vld [vmem:[#allocation5 + $0xfc] sm:$0xf]
    %v173 = vld [vmem:[#allocation5 + $0x100] sm:$0xf]
    %v174 = vld [vmem:[#allocation5 + $0x104] sm:$0xf]
    %v175 = vld [vmem:[#allocation5 + $0x108] sm:$0xf]
    %v176 = vld [vmem:[#allocation5 + $0x10c] sm:$0xf]
    %v177 = vld [vmem:[#allocation5 + $0x110] sm:$0xf]
    %v178 = vld [vmem:[#allocation5 + $0x114] sm:$0xf]
    %v179 = vld [vmem:[#allocation5 + $0x118] sm:$0xf]
    %v180 = vld [vmem:[#allocation5 + $0x11c] sm:$0xf]
    %v181 = vld [vmem:[#allocation5 + $0x120] sm:$0xf]
    %v182 = vld [vmem:[#allocation5 + $0x124] sm:$0xf]
    %v183 = vld [vmem:[#allocation5 + $0x128] sm:$0xf]
    %v184 = vld [vmem:[#allocation5 + $0x12c] sm:$0xf]
    %v185 = vld [vmem:[#allocation5 + $0x130] sm:$0xf]
    %v186 = vld [vmem:[#allocation5 + $0x134] sm:$0xf]
    %v187 = vld [vmem:[#allocation5 + $0x138] sm:$0xf]
    %v188 = vld [vmem:[#allocation5 + $0x13c] sm:$0xf]
    %v189 = vld [vmem:[#allocation5 + $0x140] sm:$0xf]
    %v190 = vld [vmem:[#allocation5 + $0x144] sm:$0xf]
    %v191 = vld [vmem:[#allocation5 + $0x148] sm:$0xf]
    %v192 = vld [vmem:[#allocation5 + $0x14c] sm:$0xf]
    %v193 = vld [vmem:[#allocation5 + $0x150] sm:$0xf]
    %v194 = vld [vmem:[#allocation5 + $0x154] sm:$0xf]
    %v195 = vld [vmem:[#allocation5 + $0x158] sm:$0xf]
    %v196 = vld [vmem:[#allocation5 + $0x15c] sm:$0xf]
    %v197 = vld [vmem:[#allocation5 + $0x160] sm:$0xf]
    %v198 = vld [vmem:[#allocation5 + $0x164] sm:$0xf]
    %v199 = vld [vmem:[#allocation5 + $0x168] sm:$0xf]
    %v200 = vld [vmem:[#allocation5 + $0x16c] sm:$0xf]
    %v201 = vld [vmem:[#allocation5 + $0x170] sm:$0xf]
    %v202 = vld [vmem:[#allocation5 + $0x174] sm:$0xf]
    %v203 = vld [vmem:[#allocation5 + $0x178] sm:$0xf]
    %v204 = vld [vmem:[#allocation5 + $0x17c] sm:$0xf]
    %v205 = vld [vmem:[#allocation5 + $0x180] sm:$0xf]
    %v206 = vld [vmem:[#allocation5 + $0x184] sm:$0xf]
    %v207 = vld [vmem:[#allocation5 + $0x188] sm:$0xf]
    %v208 = vld [vmem:[#allocation5 + $0x18c] sm:$0xf]
    %v209 = vld [vmem:[#allocation5 + $0x190] sm:$0xf]
    %v210 = vld [vmem:[#allocation5 + $0x194] sm:$0xf]
    %v211 = vld [vmem:[#allocation5 + $0x198] sm:$0xf]
    %v212 = vld [vmem:[#allocation5 + $0x19c] sm:$0xf]
    %v213 = vld [vmem:[#allocation5 + $0x1a0] sm:$0xf]
    %v214 = vld [vmem:[#allocation5 + $0x1a4] sm:$0xf]
    %v215 = vld [vmem:[#allocation5 + $0x1a8] sm:$0xf]
    %v216 = vld [vmem:[#allocation5 + $0x1ac] sm:$0xf]
    %v217 = vld [vmem:[#allocation5 + $0x1b0] sm:$0xf]
    %v218 = vld [vmem:[#allocation5 + $0x1b4] sm:$0xf]
    %v219 = vld [vmem:[#allocation5 + $0x1b8] sm:$0xf]
    %v220 = vld [vmem:[#allocation5 + $0x1bc] sm:$0xf]
    %v221 = vld [vmem:[#allocation5 + $0x1c0] sm:$0xf]
    %v222 = vld [vmem:[#allocation5 + $0x1c4] sm:$0xf]
    %v223 = vld [vmem:[#allocation5 + $0x1c8] sm:$0xf]
    %v224 = vld [vmem:[#allocation5 + $0x1cc] sm:$0xf]
    %v225 = vld [vmem:[#allocation5 + $0x1d0] sm:$0xf]
    %v226 = vld [vmem:[#allocation5 + $0x1d4] sm:$0xf]
    %v227 = vld [vmem:[#allocation5 + $0x1d8] sm:$0xf]
    %v228 = vld [vmem:[#allocation5 + $0x1dc] sm:$0xf]
    %v229 = vld [vmem:[#allocation5 + $0x1e0] sm:$0xf]
    %v230 = vld [vmem:[#allocation5 + $0x1e4] sm:$0xf]
    %v231 = vld [vmem:[#allocation5 + $0x1e8] sm:$0xf]
    %v232 = vld [vmem:[#allocation5 + $0x1ec] sm:$0xf]
    %v233 = vld [vmem:[#allocation5 + $0x1f0] sm:$0xf]
    %v234 = vld [vmem:[#allocation5 + $0x1f4] sm:$0xf]
    %v235 = vld [vmem:[#allocation5 + $0x1f8] sm:$0xf]
    %v236 = vld [vmem:[#allocation5 + $0x1fc] sm:$0xf]
    %v365 = vunpack.c.l.b16 %v109
    %v366 = vunpack.c.l.b16 %v110
    %v367 = vunpack.c.l.b16 %v111
    %v368 = vunpack.c.l.b16 %v112
    %v369 = vunpack.c.l.b16 %v113
    %v370 = vunpack.c.l.b16 %v114
    %v371 = vunpack.c.l.b16 %v115
    %v372 = vunpack.c.l.b16 %v116
    %v373 = vunpack.c.l.b16 %v117
    %v374 = vunpack.c.l.b16 %v118
    %v375 = vunpack.c.l.b16 %v119
    %v376 = vunpack.c.l.b16 %v120
    %v377 = vunpack.c.l.b16 %v121
    %v378 = vunpack.c.l.b16 %v122
    %v379 = vunpack.c.l.b16 %v123
    %v380 = vunpack.c.l.b16 %v124
    %v381 = vunpack.c.l.b16 %v125
    %v382 = vunpack.c.l.b16 %v126
    %v383 = vunpack.c.l.b16 %v127
    %v384 = vunpack.c.l.b16 %v128
    %v385 = vunpack.c.l.b16 %v129
    %v386 = vunpack.c.l.b16 %v130
    %v387 = vunpack.c.l.b16 %v131
    %v388 = vunpack.c.l.b16 %v132
    %v389 = vunpack.c.l.b16 %v133
    %v390 = vunpack.c.l.b16 %v134
    %v391 = vunpack.c.l.b16 %v135
    %v392 = vunpack.c.l.b16 %v136
    %v393 = vunpack.c.l.b16 %v137
    %v394 = vunpack.c.l.b16 %v138
    %v395 = vunpack.c.l.b16 %v139
    %v396 = vunpack.c.l.b16 %v140
    %v397 = vunpack.c.l.b16 %v141
    %v398 = vunpack.c.l.b16 %v142
    %v399 = vunpack.c.l.b16 %v143
    %v400 = vunpack.c.l.b16 %v144
    %v401 = vunpack.c.l.b16 %v145
    %v402 = vunpack.c.l.b16 %v146
    %v403 = vunpack.c.l.b16 %v147
    %v404 = vunpack.c.l.b16 %v148
    %v405 = vunpack.c.l.b16 %v149
    %v406 = vunpack.c.l.b16 %v150
    %v407 = vunpack.c.l.b16 %v151
    %v408 = vunpack.c.l.b16 %v152
    %v409 = vunpack.c.l.b16 %v153
    %v410 = vunpack.c.l.b16 %v154
    %v411 = vunpack.c.l.b16 %v155
    %v412 = vunpack.c.l.b16 %v156
    %v413 = vunpack.c.l.b16 %v157
    %v414 = vunpack.c.l.b16 %v158
    %v415 = vunpack.c.l.b16 %v159
    %v416 = vunpack.c.l.b16 %v160
    %v417 = vunpack.c.l.b16 %v161
    %v418 = vunpack.c.l.b16 %v162
    %v419 = vunpack.c.l.b16 %v163
    %v420 = vunpack.c.l.b16 %v164
    %v421 = vunpack.c.l.b16 %v165
    %v422 = vunpack.c.l.b16 %v166
    %v423 = vunpack.c.l.b16 %v167
    %v424 = vunpack.c.l.b16 %v168
    %v425 = vunpack.c.l.b16 %v169
    %v426 = vunpack.c.l.b16 %v170
    %v427 = vunpack.c.l.b16 %v171
    %v428 = vunpack.c.l.b16 %v172
    %v429 = vunpack.c.l.b16 %v173
    %v430 = vunpack.c.l.b16 %v174
    %v431 = vunpack.c.l.b16 %v175
    %v432 = vunpack.c.l.b16 %v176
    %v433 = vunpack.c.l.b16 %v177
    %v434 = vunpack.c.l.b16 %v178
    %v435 = vunpack.c.l.b16 %v179
    %v436 = vunpack.c.l.b16 %v180
    %v437 = vunpack.c.l.b16 %v181
    %v438 = vunpack.c.l.b16 %v182
    %v439 = vunpack.c.l.b16 %v183
    %v440 = vunpack.c.l.b16 %v184
    %v441 = vunpack.c.l.b16 %v185
    %v442 = vunpack.c.l.b16 %v186
    %v443 = vunpack.c.l.b16 %v187
    %v444 = vunpack.c.l.b16 %v188
    %v445 = vunpack.c.l.b16 %v189
    %v446 = vunpack.c.l.b16 %v190
    %v447 = vunpack.c.l.b16 %v191
    %v448 = vunpack.c.l.b16 %v192
    %v449 = vunpack.c.l.b16 %v193
    %v450 = vunpack.c.l.b16 %v194
    %v451 = vunpack.c.l.b16 %v195
    %v452 = vunpack.c.l.b16 %v196
    %v453 = vunpack.c.l.b16 %v197
    %v454 = vunpack.c.l.b16 %v198
    %v455 = vunpack.c.l.b16 %v199
    %v456 = vunpack.c.l.b16 %v200
    %v457 = vunpack.c.l.b16 %v201
    %v458 = vunpack.c.l.b16 %v202
    %v459 = vunpack.c.l.b16 %v203
    %v460 = vunpack.c.l.b16 %v204
    %v461 = vunpack.c.l.b16 %v205
    %v462 = vunpack.c.l.b16 %v206
    %v463 = vunpack.c.l.b16 %v207
    %v464 = vunpack.c.l.b16 %v208
    %v465 = vunpack.c.l.b16 %v209
    %v466 = vunpack.c.l.b16 %v210
    %v467 = vunpack.c.l.b16 %v211
    %v468 = vunpack.c.l.b16 %v212
    %v469 = vunpack.c.l.b16 %v213
    %v470 = vunpack.c.l.b16 %v214
    %v471 = vunpack.c.l.b16 %v215
    %v472 = vunpack.c.l.b16 %v216
    %v473 = vunpack.c.l.b16 %v217
    %v474 = vunpack.c.l.b16 %v218
    %v475 = vunpack.c.l.b16 %v219
    %v476 = vunpack.c.l.b16 %v220
    %v477 = vunpack.c.l.b16 %v221
    %v478 = vunpack.c.l.b16 %v222
    %v479 = vunpack.c.l.b16 %v223
    %v480 = vunpack.c.l.b16 %v224
    %v481 = vunpack.c.l.b16 %v225
    %v482 = vunpack.c.l.b16 %v226
    %v483 = vunpack.c.l.b16 %v227
    %v484 = vunpack.c.l.b16 %v228
    %v485 = vunpack.c.l.b16 %v229
    %v486 = vunpack.c.l.b16 %v230
    %v487 = vunpack.c.l.b16 %v231
    %v488 = vunpack.c.l.b16 %v232
    %v489 = vunpack.c.l.b16 %v233
    %v490 = vunpack.c.l.b16 %v234
    %v491 = vunpack.c.l.b16 %v235
    %v492 = vunpack.c.l.b16 %v236
    %v493 = vpack.c.b16 %v366, %v365
    %v494 = vpack.c.b16 %v368, %v367
    %v495 = vpack.c.b16 %v370, %v369
    %v496 = vpack.c.b16 %v372, %v371
    %v497 = vpack.c.b16 %v374, %v373
    %v498 = vpack.c.b16 %v376, %v375
    %v499 = vpack.c.b16 %v378, %v377
    %v500 = vpack.c.b16 %v380, %v379
    %v501 = vpack.c.b16 %v382, %v381
    %v502 = vpack.c.b16 %v384, %v383
    %v503 = vpack.c.b16 %v386, %v385
    %v504 = vpack.c.b16 %v388, %v387
    %v505 = vpack.c.b16 %v390, %v389
    %v506 = vpack.c.b16 %v392, %v391
    %v507 = vpack.c.b16 %v394, %v393
    %v508 = vpack.c.b16 %v396, %v395
    %v509 = vpack.c.b16 %v398, %v397
    %v510 = vpack.c.b16 %v400, %v399
    %v511 = vpack.c.b16 %v402, %v401
    %v512 = vpack.c.b16 %v404, %v403
    %v513 = vpack.c.b16 %v406, %v405
    %v514 = vpack.c.b16 %v408, %v407
    %v515 = vpack.c.b16 %v410, %v409
    %v516 = vpack.c.b16 %v412, %v411
    %v517 = vpack.c.b16 %v414, %v413
    %v518 = vpack.c.b16 %v416, %v415
    %v519 = vpack.c.b16 %v418, %v417
    %v520 = vpack.c.b16 %v420, %v419
    %v521 = vpack.c.b16 %v422, %v421
    %v522 = vpack.c.b16 %v424, %v423
    %v523 = vpack.c.b16 %v426, %v425
    %v524 = vpack.c.b16 %v428, %v427
    %v525 = vpack.c.b16 %v430, %v429
    %v526 = vpack.c.b16 %v432, %v431
    %v527 = vpack.c.b16 %v434, %v433
    %v528 = vpack.c.b16 %v436, %v435
    %v529 = vpack.c.b16 %v438, %v437
    %v530 = vpack.c.b16 %v440, %v439
    %v531 = vpack.c.b16 %v442, %v441
    %v532 = vpack.c.b16 %v444, %v443
    %v533 = vpack.c.b16 %v446, %v445
    %v534 = vpack.c.b16 %v448, %v447
    %v535 = vpack.c.b16 %v450, %v449
    %v536 = vpack.c.b16 %v452, %v451
    %v537 = vpack.c.b16 %v454, %v453
    %v538 = vpack.c.b16 %v456, %v455
    %v539 = vpack.c.b16 %v458, %v457
    %v540 = vpack.c.b16 %v460, %v459
    %v541 = vpack.c.b16 %v462, %v461
    %v542 = vpack.c.b16 %v464, %v463
    %v543 = vpack.c.b16 %v466, %v465
    %v544 = vpack.c.b16 %v468, %v467
    %v545 = vpack.c.b16 %v470, %v469
    %v546 = vpack.c.b16 %v472, %v471
    %v547 = vpack.c.b16 %v474, %v473
    %v548 = vpack.c.b16 %v476, %v475
    %v549 = vpack.c.b16 %v478, %v477
    %v550 = vpack.c.b16 %v480, %v479
    %v551 = vpack.c.b16 %v482, %v481
    %v552 = vpack.c.b16 %v484, %v483
    %v553 = vpack.c.b16 %v486, %v485
    %v554 = vpack.c.b16 %v488, %v487
    %v555 = vpack.c.b16 %v490, %v489
    %v556 = vpack.c.b16 %v492, %v491
    %621 = vmatprep.subr.bf16.mxu0 0
    %622 = vmatpush1.bf16.msra.mxu0 %v493
    %623 = vmatprep.subr.bf16.mxu0 0
    %624 = vmatpush1.bf16.msra.mxu0 %v494
    %625 = vmatprep.subr.bf16.mxu0 0
    %626 = vmatpush1.bf16.msra.mxu0 %v495
    %627 = vmatprep.subr.bf16.mxu0 0
    %628 = vmatpush1.bf16.msra.mxu0 %v496
    %629 = vmatprep.subr.bf16.mxu0 0
    %630 = vmatpush1.bf16.msra.mxu0 %v497
    %631 = vmatprep.subr.bf16.mxu0 0
    %632 = vmatpush1.bf16.msra.mxu0 %v498
    %633 = vmatprep.subr.bf16.mxu0 0
    %634 = vmatpush1.bf16.msra.mxu0 %v499
    %635 = vmatprep.subr.bf16.mxu0 0
    %636 = vmatpush1.bf16.msra.mxu0 %v500
    %637 = vmatprep.subr.bf16.mxu0 0
    %638 = vmatpush1.bf16.msra.mxu0 %v501
    %639 = vmatprep.subr.bf16.mxu0 0
    %640 = vmatpush1.bf16.msra.mxu0 %v502
    %641 = vmatprep.subr.bf16.mxu0 0
    %642 = vmatpush1.bf16.msra.mxu0 %v503
    %643 = vmatprep.subr.bf16.mxu0 0
    %644 = vmatpush1.bf16.msra.mxu0 %v504
    %645 = vmatprep.subr.bf16.mxu0 0
    %646 = vmatpush1.bf16.msra.mxu0 %v505
    %647 = vmatprep.subr.bf16.mxu0 0
    %648 = vmatpush1.bf16.msra.mxu0 %v506
    %649 = vmatprep.subr.bf16.mxu0 0
    %650 = vmatpush1.bf16.msra.mxu0 %v507
    %651 = vmatprep.subr.bf16.mxu0 0
    %652 = vmatpush1.bf16.msra.mxu0 %v508
    %653 = vmatprep.mubr.bf16.mxu0 %v102
    %654 = vmatmul.mubr.bf16.gmra.mrb[0].mxu0 %v101
    %v655 = vpop.f32.mrb[0].mxu0
    %v656 = vadd.f32 0.0, %v655
    %v657 = vpop.f32.mrb[0].mxu0
    %v658 = vpop.f32.mrb[0].mxu0
    %v659 = vpop.f32.mrb[0].mxu0
    %660 = vdwg.mxu0
    %661 = vmatprep.subr.bf16.mxu0 0
    %662 = vmatpush1.bf16.msra.mxu0 %v509
    %663 = vmatprep.subr.bf16.mxu0 0
    %664 = vmatpush1.bf16.msra.mxu0 %v510
    %665 = vmatprep.subr.bf16.mxu0 0
    %666 = vmatpush1.bf16.msra.mxu0 %v511
    %667 = vmatprep.subr.bf16.mxu0 0
    %668 = vmatpush1.bf16.msra.mxu0 %v512
    %669 = vmatprep.subr.bf16.mxu0 0
    %670 = vmatpush1.bf16.msra.mxu0 %v513
    %671 = vmatprep.subr.bf16.mxu0 0
    %672 = vmatpush1.bf16.msra.mxu0 %v514
    %673 = vmatprep.subr.bf16.mxu0 0
    %674 = vmatpush1.bf16.msra.mxu0 %v515
    %675 = vmatprep.subr.bf16.mxu0 0
    %676 = vmatpush1.bf16.msra.mxu0 %v516
    %677 = vmatprep.subr.bf16.mxu0 0
    %678 = vmatpush1.bf16.msra.mxu0 %v517
    %679 = vmatprep.subr.bf16.mxu0 0
    %680 = vmatpush1.bf16.msra.mxu0 %v518
    %681 = vmatprep.subr.bf16.mxu0 0
    %682 = vmatpush1.bf16.msra.mxu0 %v519
    %683 = vmatprep.subr.bf16.mxu0 0
    %684 = vmatpush1.bf16.msra.mxu0 %v520
    %685 = vmatprep.subr.bf16.mxu0 0
    %686 = vmatpush1.bf16.msra.mxu0 %v521
    %687 = vmatprep.subr.bf16.mxu0 0
    %688 = vmatpush1.bf16.msra.mxu0 %v522
    %689 = vmatprep.subr.bf16.mxu0 0
    %690 = vmatpush1.bf16.msra.mxu0 %v523
    %691 = vmatprep.subr.bf16.mxu0 0
    %692 = vmatpush1.bf16.msra.mxu0 %v524
    %693 = vmatprep.mubr.bf16.mxu0 %v104
    %694 = vmatmul.mubr.bf16.gmra.mrb[0].mxu0 %v103
    %v695 = vpop.f32.mrb[0].mxu0
    %v696 = vadd.f32 %v656, %v695
    %v697 = vpop.f32.mrb[0].mxu0
    %v698 = vpop.f32.mrb[0].mxu0
    %v699 = vpop.f32.mrb[0].mxu0
    %700 = vdwg.mxu0
    %701 = vmatprep.subr.bf16.mxu0 0
    %702 = vmatpush1.bf16.msra.mxu0 %v525
    %703 = vmatprep.subr.bf16.mxu0 0
    %704 = vmatpush1.bf16.msra.mxu0 %v526
    %705 = vmatprep.subr.bf16.mxu0 0
    %706 = vmatpush1.bf16.msra.mxu0 %v527
    %707 = vmatprep.subr.bf16.mxu0 0
    %708 = vmatpush1.bf16.msra.mxu0 %v528
    %709 = vmatprep.subr.bf16.mxu0 0
    %710 = vmatpush1.bf16.msra.mxu0 %v529
    %711 = vmatprep.subr.bf16.mxu0 0
    %712 = vmatpush1.bf16.msra.mxu0 %v530
    %713 = vmatprep.subr.bf16.mxu0 0
    %714 = vmatpush1.bf16.msra.mxu0 %v531
    %715 = vmatprep.subr.bf16.mxu0 0
    %716 = vmatpush1.bf16.msra.mxu0 %v532
    %717 = vmatprep.subr.bf16.mxu0 0
    %718 = vmatpush1.bf16.msra.mxu0 %v533
    %719 = vmatprep.subr.bf16.mxu0 0
    %720 = vmatpush1.bf16.msra.mxu0 %v534
    %721 = vmatprep.subr.bf16.mxu0 0
    %722 = vmatpush1.bf16.msra.mxu0 %v535
    %723 = vmatprep.subr.bf16.mxu0 0
    %724 = vmatpush1.bf16.msra.mxu0 %v536
    %725 = vmatprep.subr.bf16.mxu0 0
    %726 = vmatpush1.bf16.msra.mxu0 %v537
    %727 = vmatprep.subr.bf16.mxu0 0
    %728 = vmatpush1.bf16.msra.mxu0 %v538
    %729 = vmatprep.subr.bf16.mxu0 0
    %730 = vmatpush1.bf16.msra.mxu0 %v539
    %731 = vmatprep.subr.bf16.mxu0 0
    %732 = vmatpush1.bf16.msra.mxu0 %v540
    %733 = vmatprep.mubr.bf16.mxu0 %v106
    %734 = vmatmul.mubr.bf16.gmra.mrb[0].mxu0 %v105
    %v735 = vpop.f32.mrb[0].mxu0
    %v736 = vadd.f32 %v696, %v735
    %v737 = vpop.f32.mrb[0].mxu0
    %v738 = vpop.f32.mrb[0].mxu0
    %v739 = vpop.f32.mrb[0].mxu0
    %740 = vdwg.mxu0
    %741 = vmatprep.subr.bf16.mxu0 0
    %742 = vmatpush1.bf16.msra.mxu0 %v541
    %743 = vmatprep.subr.bf16.mxu0 0
    %744 = vmatpush1.bf16.msra.mxu0 %v542
    %745 = vmatprep.subr.bf16.mxu0 0
    %746 = vmatpush1.bf16.msra.mxu0 %v543
    %747 = vmatprep.subr.bf16.mxu0 0
    %748 = vmatpush1.bf16.msra.mxu0 %v544
    %749 = vmatprep.subr.bf16.mxu0 0
    %750 = vmatpush1.bf16.msra.mxu0 %v545
    %751 = vmatprep.subr.bf16.mxu0 0
    %752 = vmatpush1.bf16.msra.mxu0 %v546
    %753 = vmatprep.subr.bf16.mxu0 0
    %754 = vmatpush1.bf16.msra.mxu0 %v547
    %755 = vmatprep.subr.bf16.mxu0 0
    %756 = vmatpush1.bf16.msra.mxu0 %v548
    %757 = vmatprep.subr.bf16.mxu0 0
    %758 = vmatpush1.bf16.msra.mxu0 %v549
    %759 = vmatprep.subr.bf16.mxu0 0
    %760 = vmatpush1.bf16.msra.mxu0 %v550
    %761 = vmatprep.subr.bf16.mxu0 0
    %762 = vmatpush1.bf16.msra.mxu0 %v551
    %763 = vmatprep.subr.bf16.mxu0 0
    %764 = vmatpush1.bf16.msra.mxu0 %v552
    %765 = vmatprep.subr.bf16.mxu0 0
    %766 = vmatpush1.bf16.msra.mxu0 %v553
    %767 = vmatprep.subr.bf16.mxu0 0
    %768 = vmatpush1.bf16.msra.mxu0 %v554
    %769 = vmatprep.subr.bf16.mxu0 0
    %770 = vmatpush1.bf16.msra.mxu0 %v555
    %771 = vmatprep.subr.bf16.mxu0 0
    %772 = vmatpush1.bf16.msra.mxu0 %v556
    %773 = vmatprep.mubr.bf16.mxu0 %v108
    %774 = vmatmul.mubr.bf16.gmra.mrb[0].mxu0 %v107
    %v775 = vpop.f32.mrb[0].mxu0
    %v776 = vadd.f32 %v736, %v775
    %v777 = vpop.f32.mrb[0].mxu0
    %v778 = vpop.f32.mrb[0].mxu0
    %v779 = vpop.f32.mrb[0].mxu0
    %780 = vdwg.mxu0
    %v781 = vmul.f32 %v776, 0.05
    %v782 = vld [vmem:[#allocation7] sm:$0xff]
    %v783 = vadd.f32 %v781, %v782
    %784 = vst [vmem:[#allocation8] sm:$0xff] %v783
    // Predicated region
    $region26: #{tpu_custom_call.1} parent=1 // pred_check
      _
    $region27: #{tpu_custom_call.1} parent=1 // pred_check_branch
      %786 = sbr.rel (0) target = $region29
    $region28: #{tpu_custom_call.1} parent=1 // pred_region
      %s788 = ssub.s32 128, 128
      %789 = vsyncadd [#allocation4], %s788
      %s791 = sshll.u32 [#allocation8], 4
      %s792 = int_to_ptr.vmem [resolvable:$true] %s791
      %794 = dma.vmem_to_hbm [thread:$0]  %s792, 128, %s3, [#allocation4]
    $region29: #{tpu_custom_call.1} parent=1 // pred_fallthru
      _
    // Predicated region
    $region30: #{tpu_custom_call.1} parent=1 // pred_check
      _
    $region31: #{tpu_custom_call.1} parent=1 // pred_check_branch
      %796 = sbr.rel (0) target = $region33
    $region32: #{tpu_custom_call.1} parent=1 // pred_region
      %797 = dma.done [#allocation4], 128
    $region33: #{tpu_custom_call.1} parent=1 // pred_fallthru
      _
    %798 = vsyncpa [#allocation3], 1
    %799 = vsyncpa [#allocation6], 1
    %800 = vsyncpa [#allocation4], 1

</llo_original>
